<compile_context>
chip_gen: v5e
topology: v5e:2x2
jax: 0.10.0
libtpu: 0.0.40
codegen_flags: <defaults>
</compile_context>

<pallas_src>
import functools

import jax
import jax.numpy as jnp
from jax.experimental import pallas as pl
from jax.experimental.pallas import tpu as pltpu


def _autoencoder_kernel(x_ref,
                        w1_ref, b1_ref,
                        w2_ref, b2_ref,
                        w3_ref, b3_ref,
                        w4_ref, b4_ref,
                        out_ref):
    x = x_ref[...]                      # (TB, F) bf16

    # Hoist bias reads (tiny [1, out] tiles), reuse across the fused adds.
    b1 = b1_ref[...]
    b2 = b2_ref[...]
    b3 = b3_ref[...]
    b4 = b4_ref[...]

    # ----- encoder -----
    h1 = jnp.dot(x, w1_ref[...], preferred_element_type=jnp.float32) + b1
    h1 = jnp.maximum(h1, 0.0).astype(jnp.bfloat16)          # ReLU, re-pack bf16

    z = jnp.dot(h1, w2_ref[...], preferred_element_type=jnp.float32) + b2
    z = z.astype(jnp.bfloat16)

    # ----- decoder -----
    h2 = jnp.dot(z, w3_ref[...], preferred_element_type=jnp.float32) + b3
    h2 = jnp.maximum(h2, 0.0).astype(jnp.bfloat16)          # ReLU

    x_hat = jnp.dot(h2, w4_ref[...], preferred_element_type=jnp.float32) + b4
    out_ref[...] = x_hat.astype(out_ref.dtype)


def autoencoder_forward(x, params, *, tb=128):
    """x: [B, F] bf16/f32. params: dict of (w, b) for the 4 linear layers.

    Returns [B, F] float32 reconstruction.
    """
    w1, b1 = params["enc1"]
    w2, b2 = params["enc2"]
    w3, b3 = params["dec1"]
    w4, b4 = params["dec2"]

    x = x.astype(jnp.bfloat16)
    B, F = x.shape
    H = w1.shape[1]
    L = w2.shape[1]

    # Pad the batch to a tile multiple (padded rows compute garbage that is
    # sliced off; weights/biases are unaffected).
    B_pad = pl.cdiv(B, tb) * tb
    if B_pad != B:
        x = jnp.pad(x, ((0, B_pad - B), (0, 0)))

    grid = (B_pad // tb,)

    # Batch-tiled specs for x / out; constant-index full blocks for params so
    # they remain resident in VMEM across grid steps.
    x_spec = pl.BlockSpec((tb, F), lambda i: (i, 0))
    out_spec = pl.BlockSpec((tb, F), lambda i: (i, 0))

    def const_spec(shape):
        return pl.BlockSpec(shape, lambda i: tuple(0 for _ in shape))

    flops = 2 * B_pad * (F * H + H * L + L * H + H * F)
    bytes_accessed = (
        x.size * x.dtype.itemsize
        + B_pad * F * 4                                        # f32 output
        + sum(a.size * a.dtype.itemsize
              for a in (w1, b1, w2, b2, w3, b3, w4, b4))
    )
    cost = pl.CostEstimate(flops=flops, transcendentals=0,
                           bytes_accessed=bytes_accessed)

    out = pl.pallas_call(
        _autoencoder_kernel,
        out_shape=jax.ShapeDtypeStruct((B_pad, F), jnp.float32),
        grid=grid,
        in_specs=[
            x_spec,
            const_spec(w1.shape), const_spec(b1.shape),
            const_spec(w2.shape), const_spec(b2.shape),
            const_spec(w3.shape), const_spec(b3.shape),
            const_spec(w4.shape), const_spec(b4.shape),
        ],
        out_specs=out_spec,
        compiler_params=pltpu.CompilerParams(
            dimension_semantics=("parallel",),
            vmem_limit_bytes=64 << 20,
        ),
        cost_estimate=cost,
    )(x, w1, b1, w2, b2, w3, b3, w4, b4)

    if B_pad != B:
        out = out[:B]
    return out


def init_params(key, in_features, hidden, latent):
    """Deterministic synthetic parameter init (PyTorch-like uniform fan-in).

    Weights stored [in, out] in bf16 (MXU inputs); biases [1, out] in f32.
    """
    def linear(key, fan_in, fan_out):
        kw, kb = jax.random.split(key)
        bound = 1.0 / jnp.sqrt(fan_in)
        w = jax.random.uniform(kw, (fan_in, fan_out), jnp.float32, -bound, bound)
        b = jax.random.uniform(kb, (1, fan_out), jnp.float32, -bound, bound)
        return w.astype(jnp.bfloat16), b

    k1, k2, k3, k4 = jax.random.split(key, 4)
    return {
        "enc1": linear(k1, in_features, hidden),
        "enc2": linear(k2, hidden, latent),
        "dec1": linear(k3, latent, hidden),
        "dec2": linear(k4, hidden, in_features),
    }


def reference_forward(x, params):
    """Pure-JAX reference mirroring the kernel's bf16-input / f32-accum math."""
    w1, b1 = params["enc1"]
    w2, b2 = params["enc2"]
    w3, b3 = params["dec1"]
    w4, b4 = params["dec2"]
    x = x.astype(jnp.bfloat16)
    f32 = jnp.float32
    h1 = jnp.maximum(jnp.dot(x, w1, preferred_element_type=f32) + b1, 0.0)
    h1 = h1.astype(jnp.bfloat16)
    z = (jnp.dot(h1, w2, preferred_element_type=f32) + b2).astype(jnp.bfloat16)
    h2 = jnp.maximum(jnp.dot(z, w3, preferred_element_type=f32) + b3, 0.0)
    h2 = h2.astype(jnp.bfloat16)
    return jnp.dot(h2, w4, preferred_element_type=f32) + b4


if __name__ == "__main__":
    # Lane-dense sizes: batch 256 (2 grid steps of 128 rows), F/H/L multiples
    # of 128 so stores are unmasked and the MXU contraction width is full.
    B, F, H, L = 256, 256, 128, 128

    key = jax.random.PRNGKey(0)
    kx, kp = jax.random.split(key)
    x = jax.random.normal(kx, (B, F), jnp.float32)
    params = init_params(kp, F, H, L)

    fwd = jax.jit(functools.partial(autoencoder_forward, tb=128))
    x_hat = jax.block_until_ready(fwd(x, params))

    ref = reference_forward(x, params)
    assert x_hat.shape == (B, F)
    # bf16 matmul inputs (f32 accumulation) -> loosened tolerance vs pure f32.
    assert jnp.allclose(x_hat, ref, atol=2e-2, rtol=2e-2), "mismatch vs reference"

    print("KERNEL_OK")
</pallas_src>

<mosaic_0001>
module attributes {stable_mosaic.version = 11 : i64} {
  func.func @_autoencoder_kernel(%arg0: i32, %arg1: memref<128x256xbf16, #tpu.memory_space<vmem>>, %arg2: memref<256x128xbf16, #tpu.memory_space<vmem>>, %arg3: memref<1x128xf32, #tpu.memory_space<vmem>>, %arg4: memref<128x128xbf16, #tpu.memory_space<vmem>>, %arg5: memref<1x128xf32, #tpu.memory_space<vmem>>, %arg6: memref<128x128xbf16, #tpu.memory_space<vmem>>, %arg7: memref<1x128xf32, #tpu.memory_space<vmem>>, %arg8: memref<128x256xbf16, #tpu.memory_space<vmem>>, %arg9: memref<1x256xf32, #tpu.memory_space<vmem>>, %arg10: memref<128x256xf32, #tpu.memory_space<vmem>>) attributes {dimension_semantics = [#tpu.dimension_semantics<parallel>], iteration_bounds = array<i64: 2>, scalar_prefetch = 0 : i64, scratch_operands = 0 : i64, tpu.core_type = #tpu.core_type<tc>, window_params = [{transform_indices = @transform_0, window_bounds = array<i64: 128, 256>}, {pipeline_mode = #tpu.pipeline_mode<synchronous>, transform_indices = @transform_1, window_bounds = array<i64: 256, 128>}, {pipeline_mode = #tpu.pipeline_mode<synchronous>, transform_indices = @transform_2, window_bounds = array<i64: 1, 128>}, {pipeline_mode = #tpu.pipeline_mode<synchronous>, transform_indices = @transform_3, window_bounds = array<i64: 128, 128>}, {pipeline_mode = #tpu.pipeline_mode<synchronous>, transform_indices = @transform_4, window_bounds = array<i64: 1, 128>}, {pipeline_mode = #tpu.pipeline_mode<synchronous>, transform_indices = @transform_5, window_bounds = array<i64: 128, 128>}, {pipeline_mode = #tpu.pipeline_mode<synchronous>, transform_indices = @transform_6, window_bounds = array<i64: 1, 128>}, {pipeline_mode = #tpu.pipeline_mode<synchronous>, transform_indices = @transform_7, window_bounds = array<i64: 128, 256>}, {pipeline_mode = #tpu.pipeline_mode<synchronous>, transform_indices = @transform_8, window_bounds = array<i64: 1, 256>}, {transform_indices = @transform_9, window_bounds = array<i64: 128, 256>}]} {
    %c0 = arith.constant 0 : index
    %c0_0 = arith.constant 0 : index
    %0 = vector.load %arg1[%c0, %c0_0] : memref<128x256xbf16, #tpu.memory_space<vmem>>, vector<128x256xbf16>
    %c0_1 = arith.constant 0 : index
    %c0_2 = arith.constant 0 : index
    %1 = vector.load %arg3[%c0_1, %c0_2] : memref<1x128xf32, #tpu.memory_space<vmem>>, vector<1x128xf32>
    %c0_3 = arith.constant 0 : index
    %c0_4 = arith.constant 0 : index
    %2 = vector.load %arg5[%c0_3, %c0_4] : memref<1x128xf32, #tpu.memory_space<vmem>>, vector<1x128xf32>
    %c0_5 = arith.constant 0 : index
    %c0_6 = arith.constant 0 : index
    %3 = vector.load %arg7[%c0_5, %c0_6] : memref<1x128xf32, #tpu.memory_space<vmem>>, vector<1x128xf32>
    %c0_7 = arith.constant 0 : index
    %c0_8 = arith.constant 0 : index
    %4 = vector.load %arg9[%c0_7, %c0_8] : memref<1x256xf32, #tpu.memory_space<vmem>>, vector<1x256xf32>
    %c0_9 = arith.constant 0 : index
    %c0_10 = arith.constant 0 : index
    %5 = vector.load %arg2[%c0_9, %c0_10] : memref<256x128xbf16, #tpu.memory_space<vmem>>, vector<256x128xbf16>
    %cst = arith.constant dense<0.000000e+00> : vector<128x128xf32>
    %6 = tpu.matmul %0, %5, %cst {dimension_numbers = #tpu.dot_dimension_numbers<[1], [0], [0], [1], [0, 0, 1, 1], [], []>} : vector<128x256xbf16>, vector<256x128xbf16>, vector<128x128xf32> -> vector<128x128xf32>
    %7 = vector.broadcast %1 : vector<1x128xf32> to vector<128x128xf32>
    %8 = arith.addf %6, %7 : vector<128x128xf32>
    %cst_11 = arith.constant 0.000000e+00 : f32
    %9 = vector.broadcast %cst_11 : f32 to vector<128x128xf32>
    %10 = arith.maximumf %8, %9 : vector<128x128xf32>
    %11 = arith.truncf %10 : vector<128x128xf32> to vector<128x128xbf16>
    %c0_12 = arith.constant 0 : index
    %c0_13 = arith.constant 0 : index
    %12 = vector.load %arg4[%c0_12, %c0_13] : memref<128x128xbf16, #tpu.memory_space<vmem>>, vector<128x128xbf16>
    %cst_14 = arith.constant dense<0.000000e+00> : vector<128x128xf32>
    %13 = tpu.matmul %11, %12, %cst_14 {dimension_numbers = #tpu.dot_dimension_numbers<[1], [0], [0], [1], [0, 0, 1, 1], [], []>} : vector<128x128xbf16>, vector<128x128xbf16>, vector<128x128xf32> -> vector<128x128xf32>
    %14 = vector.broadcast %2 : vector<1x128xf32> to vector<128x128xf32>
    %15 = arith.addf %13, %14 : vector<128x128xf32>
    %16 = arith.truncf %15 : vector<128x128xf32> to vector<128x128xbf16>
    %c0_15 = arith.constant 0 : index
    %c0_16 = arith.constant 0 : index
    %17 = vector.load %arg6[%c0_15, %c0_16] : memref<128x128xbf16, #tpu.memory_space<vmem>>, vector<128x128xbf16>
    %cst_17 = arith.constant dense<0.000000e+00> : vector<128x128xf32>
    %18 = tpu.matmul %16, %17, %cst_17 {dimension_numbers = #tpu.dot_dimension_numbers<[1], [0], [0], [1], [0, 0, 1, 1], [], []>} : vector<128x128xbf16>, vector<128x128xbf16>, vector<128x128xf32> -> vector<128x128xf32>
    %19 = vector.broadcast %3 : vector<1x128xf32> to vector<128x128xf32>
    %20 = arith.addf %18, %19 : vector<128x128xf32>
    %cst_18 = arith.constant 0.000000e+00 : f32
    %21 = vector.broadcast %cst_18 : f32 to vector<128x128xf32>
    %22 = arith.maximumf %20, %21 : vector<128x128xf32>
    %23 = arith.truncf %22 : vector<128x128xf32> to vector<128x128xbf16>
    %c0_19 = arith.constant 0 : index
    %c0_20 = arith.constant 0 : index
    %24 = vector.load %arg8[%c0_19, %c0_20] : memref<128x256xbf16, #tpu.memory_space<vmem>>, vector<128x256xbf16>
    %cst_21 = arith.constant dense<0.000000e+00> : vector<128x256xf32>
    %25 = tpu.matmul %23, %24, %cst_21 {dimension_numbers = #tpu.dot_dimension_numbers<[1], [0], [0], [1], [0, 0, 1, 1], [], []>} : vector<128x128xbf16>, vector<128x256xbf16>, vector<128x256xf32> -> vector<128x256xf32>
    %26 = vector.broadcast %4 : vector<1x256xf32> to vector<128x256xf32>
    %27 = arith.addf %25, %26 : vector<128x256xf32>
    %c0_22 = arith.constant 0 : index
    %c0_23 = arith.constant 0 : index
    %28 = vector.load %arg10[%c0_22, %c0_23] : memref<128x256xf32, #tpu.memory_space<vmem>>, vector<128x256xf32>
    tpu.vector_store %arg10[%c0_22, %c0_23], %27 {strides = array<i32>} : memref<128x256xf32, #tpu.memory_space<vmem>>, vector<128x256xf32>,
    return
  }
  func.func @transform_0(%arg0: i32) -> (i32, i32) {
    %c0_i32 = arith.constant 0 : i32
    %c0_i32_0 = arith.constant 0 : i32
    return %arg0, %c0_i32 : i32, i32
  }
  func.func @transform_1(%arg0: i32) -> (i32, i32) {
    %c0_i32 = arith.constant 0 : i32
    %c0_i32_0 = arith.constant 0 : i32
    %c0_i32_1 = arith.constant 0 : i32
    return %c0_i32, %c0_i32_0 : i32, i32
  }
  func.func @transform_2(%arg0: i32) -> (i32, i32) {
    %c0_i32 = arith.constant 0 : i32
    %c0_i32_0 = arith.constant 0 : i32
    %c0_i32_1 = arith.constant 0 : i32
    return %c0_i32, %c0_i32_0 : i32, i32
  }
  func.func @transform_3(%arg0: i32) -> (i32, i32) {
    %c0_i32 = arith.constant 0 : i32
    %c0_i32_0 = arith.constant 0 : i32
    %c0_i32_1 = arith.constant 0 : i32
    return %c0_i32, %c0_i32_0 : i32, i32
  }
  func.func @transform_4(%arg0: i32) -> (i32, i32) {
    %c0_i32 = arith.constant 0 : i32
    %c0_i32_0 = arith.constant 0 : i32
    %c0_i32_1 = arith.constant 0 : i32
    return %c0_i32, %c0_i32_0 : i32, i32
  }
  func.func @transform_5(%arg0: i32) -> (i32, i32) {
    %c0_i32 = arith.constant 0 : i32
    %c0_i32_0 = arith.constant 0 : i32
    %c0_i32_1 = arith.constant 0 : i32
    return %c0_i32, %c0_i32_0 : i32, i32
  }
  func.func @transform_6(%arg0: i32) -> (i32, i32) {
    %c0_i32 = arith.constant 0 : i32
    %c0_i32_0 = arith.constant 0 : i32
    %c0_i32_1 = arith.constant 0 : i32
    return %c0_i32, %c0_i32_0 : i32, i32
  }
  func.func @transform_7(%arg0: i32) -> (i32, i32) {
    %c0_i32 = arith.constant 0 : i32
    %c0_i32_0 = arith.constant 0 : i32
    %c0_i32_1 = arith.constant 0 : i32
    return %c0_i32, %c0_i32_0 : i32, i32
  }
  func.func @transform_8(%arg0: i32) -> (i32, i32) {
    %c0_i32 = arith.constant 0 : i32
    %c0_i32_0 = arith.constant 0 : i32
    %c0_i32_1 = arith.constant 0 : i32
    return %c0_i32, %c0_i32_0 : i32, i32
  }
  func.func @transform_9(%arg0: i32) -> (i32, i32) {
    %c0_i32 = arith.constant 0 : i32
    %c0_i32_0 = arith.constant 0 : i32
    return %arg0, %c0_i32 : i32, i32
  }
}

</mosaic_0001>

<llo_original>
// kernel: autoencoder_forward.1
$region0: #{autoencoder_forward.1}
  #allocation0 [shape = 'u32[]', space=smem, size = 0x4, offset = 0x4, fixed_abs, tag = 'smem constant byte address 0x4 - core index']
  #allocation1 [shape = 'u32[72,128]{1,0:T(1,128)}', space=vmem, size = 0x9000, scoped, tag = 'internal scratch']
  %s0 = inlined_call_operand.vmem [shape: bf16[256,256], index: 0, kind: input, shape index: {}]
  %s1 = inlined_call_operand.vmem [shape: bf16[256,128], index: 1, kind: input, shape index: {}]
  %s2 = inlined_call_operand.vmem [shape: f32[1,128], index: 2, kind: input, shape index: {}]
  %s3 = inlined_call_operand.vmem [shape: bf16[128,128], index: 3, kind: input, shape index: {}]
  %s4 = inlined_call_operand.vmem [shape: f32[1,128], index: 4, kind: input, shape index: {}]
  %s5 = inlined_call_operand.vmem [shape: bf16[128,128], index: 5, kind: input, shape index: {}]
  %s6 = inlined_call_operand.vmem [shape: f32[1,128], index: 6, kind: input, shape index: {}]
  %s7 = inlined_call_operand.vmem [shape: bf16[128,256], index: 7, kind: input, shape index: {}]
  %s8 = inlined_call_operand.vmem [shape: f32[1,256], index: 8, kind: input, shape index: {}]
  %s9 = inlined_call_operand.hbm [shape: f32[256,256], index: 9, kind: output, shape index: {}]
  %s10 = sld [smem:[#allocation0]]
  $region69: #{autoencoder_forward.1} parent=0
    _
  %s12 = ssub.s32 1, %s10
  %s13 = scalar_select 0, %s12, %s10
  $region1: #{autoencoder_forward.1} parent=0
    #allocation2 [shape = 'u8[262144]{0}', space=vmem, size = 0x40000, scoped, tag = 'output window, operand 0']
    #allocation3 [shape = 's32[2]{0}', space=sflag, size = 0x8, scoped, tag = 'scoped memory for autoencoder_forward.1']
    %14 = vsyncpa [#allocation3], 0
    %s15 = scalar_lea.sflag [#allocation3], 1
    %16 = vsyncpa %s15, 0
    loop: start=0, step=1, limit=4
    $region2: #{autoencoder_forward.1} parent=1 // loop_pre_header
      _
    $region3: #{autoencoder_forward.1} parent=1 // loop_header
      %s18 = sphi 0, %s22
      %p19 = scmp.ge.s32.totalorder %s18, 4
      %s28 = sphi 0, %s30
      %s31 = sphi 0, %s28
      %s32 = sphi 0, %s31
      %s48 = sphi 0, %s32
      %s52 = sphi 0, %s52
      %s54 = sphi 0, %s52
      %s55 = sphi 0, %s54
      %s69 = sphi 0, %s55
      %s73 = sphi 0, %s73
      %s75 = sphi 0, %s73
      %s76 = sphi 0, %s75
      %s90 = sphi 0, %s76
      %s94 = sphi 0, %s94
      %s96 = sphi 0, %s94
      %s97 = sphi 0, %s96
      %s111 = sphi 0, %s97
      %s115 = sphi 0, %s115
      %s117 = sphi 0, %s115
      %s118 = sphi 0, %s117
      %s132 = sphi 0, %s118
      %s136 = sphi 0, %s136
      %s138 = sphi 0, %s136
      %s139 = sphi 0, %s138
      %s153 = sphi 0, %s139
      %s157 = sphi 0, %s157
      %s159 = sphi 0, %s157
      %s160 = sphi 0, %s159
      %s174 = sphi 0, %s160
      %s178 = sphi 0, %s178
      %s180 = sphi 0, %s178
      %s181 = sphi 0, %s180
      %s195 = sphi 0, %s181
      %s199 = sphi 0, %s199
      %s201 = sphi 0, %s199
      %s202 = sphi 0, %s201
      %s216 = sphi 0, %s202
      %s222 = sphi 0, %s224
      %s225 = sphi 0, %s222
      %s226 = sphi 0, %s225
      %s242 = sphi 0, %s226
    $region4: #{autoencoder_forward.1} parent=1 // loop_header_branch
      %21 = sbr.rel (%p19) target = $region8
    $region5: #{autoencoder_forward.1} parent=1 // loop_body
      %s23 = ssub.s32 %s18, 1
      %s24 = ssub.s32 %s18, 2
      %s25 = sadd.s32 %s18, 1
      %s26 = ssub.s32 %s18, %s25
      %p27 = scmp.eq.s32.totalorder %s26, 0
      %s29 = sadd.s32 %s28, 1
      %s30 = scalar_select %p27, %s28, %s29
      %p33 = pneg %p27
      %p34 = scmp.eq.s32.totalorder %s18, 1
      %p35 = por %p33, %p34
      %p36 = scmp.ne.s32.totalorder %s28, %s31
      %p37 = scmp.eq.s32.totalorder %s18, 0
      %p38 = por %p36, %p37
      %p39 = scmp.ne.s32.totalorder %s28, %s31
      %p40 = scmp.eq.s32.totalorder %s23, 1
      %p41 = por %p39, %p40
      %p42 = scmp.ne.s32.totalorder %s31, %s32
      %p43 = scmp.eq.s32.totalorder %s23, 0
      %p44 = por %p42, %p43
      %p45 = scmp.ne.s32.totalorder %s31, %s32
      %p46 = scmp.eq.s32.totalorder %s24, 1
      %p47 = por %p45, %p46
      %p49 = scmp.ne.s32.totalorder %s32, %s48
      %p50 = scmp.eq.s32.totalorder %s24, 0
      %p51 = por %p49, %p50
      %s53 = sadd.s32 %s52, 1
      %p56 = scmp.eq.s32.totalorder %s18, 1
      %p57 = scmp.ne.s32.totalorder %s52, %s54
      %p58 = scmp.eq.s32.totalorder %s18, 0
      %p59 = por %p57, %p58
      %p60 = scmp.ne.s32.totalorder %s52, %s54
      %p61 = scmp.eq.s32.totalorder %s23, 1
      %p62 = por %p60, %p61
      %p63 = scmp.ne.s32.totalorder %s54, %s55
      %p64 = scmp.eq.s32.totalorder %s23, 0
      %p65 = por %p63, %p64
      %p66 = scmp.ne.s32.totalorder %s54, %s55
      %p67 = scmp.eq.s32.totalorder %s24, 1
      %p68 = por %p66, %p67
      %p70 = scmp.ne.s32.totalorder %s55, %s69
      %p71 = scmp.eq.s32.totalorder %s24, 0
      %p72 = por %p70, %p71
      %s74 = sadd.s32 %s73, 1
      %p77 = scmp.eq.s32.totalorder %s18, 1
      %p78 = scmp.ne.s32.totalorder %s73, %s75
      %p79 = scmp.eq.s32.totalorder %s18, 0
      %p80 = por %p78, %p79
      %p81 = scmp.ne.s32.totalorder %s73, %s75
      %p82 = scmp.eq.s32.totalorder %s23, 1
      %p83 = por %p81, %p82
      %p84 = scmp.ne.s32.totalorder %s75, %s76
      %p85 = scmp.eq.s32.totalorder %s23, 0
      %p86 = por %p84, %p85
      %p87 = scmp.ne.s32.totalorder %s75, %s76
      %p88 = scmp.eq.s32.totalorder %s24, 1
      %p89 = por %p87, %p88
      %p91 = scmp.ne.s32.totalorder %s76, %s90
      %p92 = scmp.eq.s32.totalorder %s24, 0
      %p93 = por %p91, %p92
      %s95 = sadd.s32 %s94, 1
      %p98 = scmp.eq.s32.totalorder %s18, 1
      %p99 = scmp.ne.s32.totalorder %s94, %s96
      %p100 = scmp.eq.s32.totalorder %s18, 0
      %p101 = por %p99, %p100
      %p102 = scmp.ne.s32.totalorder %s94, %s96
      %p103 = scmp.eq.s32.totalorder %s23, 1
      %p104 = por %p102, %p103
      %p105 = scmp.ne.s32.totalorder %s96, %s97
      %p106 = scmp.eq.s32.totalorder %s23, 0
      %p107 = por %p105, %p106
      %p108 = scmp.ne.s32.totalorder %s96, %s97
      %p109 = scmp.eq.s32.totalorder %s24, 1
      %p110 = por %p108, %p109
      %p112 = scmp.ne.s32.totalorder %s97, %s111
      %p113 = scmp.eq.s32.totalorder %s24, 0
      %p114 = por %p112, %p113
      %s116 = sadd.s32 %s115, 1
      %p119 = scmp.eq.s32.totalorder %s18, 1
      %p120 = scmp.ne.s32.totalorder %s115, %s117
      %p121 = scmp.eq.s32.totalorder %s18, 0
      %p122 = por %p120, %p121
      %p123 = scmp.ne.s32.totalorder %s115, %s117
      %p124 = scmp.eq.s32.totalorder %s23, 1
      %p125 = por %p123, %p124
      %p126 = scmp.ne.s32.totalorder %s117, %s118
      %p127 = scmp.eq.s32.totalorder %s23, 0
      %p128 = por %p126, %p127
      %p129 = scmp.ne.s32.totalorder %s117, %s118
      %p130 = scmp.eq.s32.totalorder %s24, 1
      %p131 = por %p129, %p130
      %p133 = scmp.ne.s32.totalorder %s118, %s132
      %p134 = scmp.eq.s32.totalorder %s24, 0
      %p135 = por %p133, %p134
      %s137 = sadd.s32 %s136, 1
      %p140 = scmp.eq.s32.totalorder %s18, 1
      %p141 = scmp.ne.s32.totalorder %s136, %s138
      %p142 = scmp.eq.s32.totalorder %s18, 0
      %p143 = por %p141, %p142
      %p144 = scmp.ne.s32.totalorder %s136, %s138
      %p145 = scmp.eq.s32.totalorder %s23, 1
      %p146 = por %p144, %p145
      %p147 = scmp.ne.s32.totalorder %s138, %s139
      %p148 = scmp.eq.s32.totalorder %s23, 0
      %p149 = por %p147, %p148
      %p150 = scmp.ne.s32.totalorder %s138, %s139
      %p151 = scmp.eq.s32.totalorder %s24, 1
      %p152 = por %p150, %p151
      %p154 = scmp.ne.s32.totalorder %s139, %s153
      %p155 = scmp.eq.s32.totalorder %s24, 0
      %p156 = por %p154, %p155
      %s158 = sadd.s32 %s157, 1
      %p161 = scmp.eq.s32.totalorder %s18, 1
      %p162 = scmp.ne.s32.totalorder %s157, %s159
      %p163 = scmp.eq.s32.totalorder %s18, 0
      %p164 = por %p162, %p163
      %p165 = scmp.ne.s32.totalorder %s157, %s159
      %p166 = scmp.eq.s32.totalorder %s23, 1
      %p167 = por %p165, %p166
      %p168 = scmp.ne.s32.totalorder %s159, %s160
      %p169 = scmp.eq.s32.totalorder %s23, 0
      %p170 = por %p168, %p169
      %p171 = scmp.ne.s32.totalorder %s159, %s160
      %p172 = scmp.eq.s32.totalorder %s24, 1
      %p173 = por %p171, %p172
      %p175 = scmp.ne.s32.totalorder %s160, %s174
      %p176 = scmp.eq.s32.totalorder %s24, 0
      %p177 = por %p175, %p176
      %s179 = sadd.s32 %s178, 1
      %p182 = scmp.eq.s32.totalorder %s18, 1
      %p183 = scmp.ne.s32.totalorder %s178, %s180
      %p184 = scmp.eq.s32.totalorder %s18, 0
      %p185 = por %p183, %p184
      %p186 = scmp.ne.s32.totalorder %s178, %s180
      %p187 = scmp.eq.s32.totalorder %s23, 1
      %p188 = por %p186, %p187
      %p189 = scmp.ne.s32.totalorder %s180, %s181
      %p190 = scmp.eq.s32.totalorder %s23, 0
      %p191 = por %p189, %p190
      %p192 = scmp.ne.s32.totalorder %s180, %s181
      %p193 = scmp.eq.s32.totalorder %s24, 1
      %p194 = por %p192, %p193
      %p196 = scmp.ne.s32.totalorder %s181, %s195
      %p197 = scmp.eq.s32.totalorder %s24, 0
      %p198 = por %p196, %p197
      %s200 = sadd.s32 %s199, 1
      %p203 = scmp.eq.s32.totalorder %s18, 1
      %p204 = scmp.ne.s32.totalorder %s199, %s201
      %p205 = scmp.eq.s32.totalorder %s18, 0
      %p206 = por %p204, %p205
      %p207 = scmp.ne.s32.totalorder %s199, %s201
      %p208 = scmp.eq.s32.totalorder %s23, 1
      %p209 = por %p207, %p208
      %p210 = scmp.ne.s32.totalorder %s201, %s202
      %p211 = scmp.eq.s32.totalorder %s23, 0
      %p212 = por %p210, %p211
      %p213 = scmp.ne.s32.totalorder %s201, %s202
      %p214 = scmp.eq.s32.totalorder %s24, 1
      %p215 = por %p213, %p214
      %p217 = scmp.ne.s32.totalorder %s202, %s216
      %p218 = scmp.eq.s32.totalorder %s24, 0
      %p219 = por %p217, %p218
      %s220 = ssub.s32 %s18, %s25
      %p221 = scmp.eq.s32.totalorder %s220, 0
      %s223 = sadd.s32 %s222, 1
      %s224 = scalar_select %p221, %s222, %s223
      %p227 = pneg %p221
      %p228 = scmp.eq.s32.totalorder %s18, 1
      %p229 = por %p227, %p228
      %p230 = scmp.ne.s32.totalorder %s222, %s225
      %p231 = scmp.eq.s32.totalorder %s18, 0
      %p232 = por %p230, %p231
      %p233 = scmp.ne.s32.totalorder %s222, %s225
      %p234 = scmp.eq.s32.totalorder %s23, 1
      %p235 = por %p233, %p234
      %p236 = scmp.ne.s32.totalorder %s225, %s226
      %p237 = scmp.eq.s32.totalorder %s23, 0
      %p238 = por %p236, %p237
      %p239 = scmp.ne.s32.totalorder %s225, %s226
      %p240 = scmp.eq.s32.totalorder %s24, 1
      %p241 = por %p239, %p240
      %p243 = scmp.ne.s32.totalorder %s226, %s242
      %p244 = scmp.eq.s32.totalorder %s24, 0
      %p245 = por %p243, %p244
      %p246 = scmp.le.s32.totalorder 1, %s18
      %p247 = scmp.lt.s32.totalorder %s18, 3
      %p248 = pnand %p246, %p247
      %p249 = pneg %p248
      // Predicated region
      $region9: #{autoencoder_forward.1} parent=5 // pred_check
        _
      $region10: #{autoencoder_forward.1} parent=5 // pred_check_branch
        %251 = sbr.rel (%p248) target = $region12
      $region11: #{autoencoder_forward.1} parent=5 // pred_region
        %s252 = ssub.s32 %s18, 1
        // Predicated region
        $region13: #{autoencoder_forward.1} parent=11 // pred_check
          %p253 = pneg %p65
        $region14: #{autoencoder_forward.1} parent=11 // pred_check_branch
          %255 = sbr.rel (%p253) target = $region16
        $region15: #{autoencoder_forward.1} parent=11 // pred_region
          _
        $region16: #{autoencoder_forward.1} parent=11 // pred_fallthru
          _
        // Predicated region
        $region17: #{autoencoder_forward.1} parent=11 // pred_check
          %p256 = pneg %p86
        $region18: #{autoencoder_forward.1} parent=11 // pred_check_branch
          %258 = sbr.rel (%p256) target = $region20
        $region19: #{autoencoder_forward.1} parent=11 // pred_region
          _
        $region20: #{autoencoder_forward.1} parent=11 // pred_fallthru
          _
        // Predicated region
        $region21: #{autoencoder_forward.1} parent=11 // pred_check
          %p259 = pneg %p107
        $region22: #{autoencoder_forward.1} parent=11 // pred_check_branch
          %261 = sbr.rel (%p259) target = $region24
        $region23: #{autoencoder_forward.1} parent=11 // pred_region
          _
        $region24: #{autoencoder_forward.1} parent=11 // pred_fallthru
          _
        // Predicated region
        $region25: #{autoencoder_forward.1} parent=11 // pred_check
          %p262 = pneg %p128
        $region26: #{autoencoder_forward.1} parent=11 // pred_check_branch
          %264 = sbr.rel (%p262) target = $region28
        $region27: #{autoencoder_forward.1} parent=11 // pred_region
          _
        $region28: #{autoencoder_forward.1} parent=11 // pred_fallthru
          _
        // Predicated region
        $region29: #{autoencoder_forward.1} parent=11 // pred_check
          %p265 = pneg %p149
        $region30: #{autoencoder_forward.1} parent=11 // pred_check_branch
          %267 = sbr.rel (%p265) target = $region32
        $region31: #{autoencoder_forward.1} parent=11 // pred_region
          _
        $region32: #{autoencoder_forward.1} parent=11 // pred_fallthru
          _
        // Predicated region
        $region33: #{autoencoder_forward.1} parent=11 // pred_check
          %p268 = pneg %p170
        $region34: #{autoencoder_forward.1} parent=11 // pred_check_branch
          %270 = sbr.rel (%p268) target = $region36
        $region35: #{autoencoder_forward.1} parent=11 // pred_region
          _
        $region36: #{autoencoder_forward.1} parent=11 // pred_fallthru
          _
        // Predicated region
        $region37: #{autoencoder_forward.1} parent=11 // pred_check
          %p271 = pneg %p191
        $region38: #{autoencoder_forward.1} parent=11 // pred_check_branch
          %273 = sbr.rel (%p271) target = $region40
        $region39: #{autoencoder_forward.1} parent=11 // pred_region
          _
        $region40: #{autoencoder_forward.1} parent=11 // pred_fallthru
          _
        // Predicated region
        $region41: #{autoencoder_forward.1} parent=11 // pred_check
          %p274 = pneg %p212
        $region42: #{autoencoder_forward.1} parent=11 // pred_check_branch
          %276 = sbr.rel (%p274) target = $region44
        $region43: #{autoencoder_forward.1} parent=11 // pred_region
          _
        $region44: #{autoencoder_forward.1} parent=11 // pred_fallthru
          _
      $region12: #{autoencoder_forward.1} parent=5 // pred_fallthru
        _
      %p277 = scmp.lt.s32.totalorder %s18, 2
      // Predicated region
      $region45: #{autoencoder_forward.1} parent=5 // pred_check
        %p278 = pneg %p277
      $region46: #{autoencoder_forward.1} parent=5 // pred_check_branch
        %280 = sbr.rel (%p278) target = $region48
      $region47: #{autoencoder_forward.1} parent=5 // pred_region
        // Predicated region
        $region49: #{autoencoder_forward.1} parent=47 // pred_check
          %p281 = pneg %p38
        $region50: #{autoencoder_forward.1} parent=47 // pred_check_branch
          %283 = sbr.rel (%p281) target = $region52
        $region51: #{autoencoder_forward.1} parent=47 // pred_region
          %s284 = smul.u32 16, %s18
          %p285 = scmp.lt.s32.totalorder %s284, 31
          %s286 = scalar_select %p285, %s284, 31
          %s287 = smul.addr %s286, 2
          %s288 = smul.addr %s287, 4
          %s289 = scalar_lea.vmem %s0, %s288
          %s290 = smul.u32 16, %s18
        $region52: #{autoencoder_forward.1} parent=47 // pred_fallthru
          _
      $region48: #{autoencoder_forward.1} parent=5 // pred_fallthru
        _
      %p291 = scmp.le.s32.totalorder 1, %s18
      %p292 = scmp.lt.s32.totalorder %s18, 3
      %p293 = pnand %p291, %p292
      %p294 = pneg %p293
      // Predicated region
      $region53: #{autoencoder_forward.1} parent=5 // pred_check
        _
      $region54: #{autoencoder_forward.1} parent=5 // pred_check_branch
        %296 = sbr.rel (%p293) target = $region56
      $region55: #{autoencoder_forward.1} parent=5 // pred_region
        %s297 = ssub.s32 %s18, 1
        %s298 = smul.u32 16, %s23
        %p299 = scmp.lt.s32.totalorder %s298, 31
        %s300 = scalar_select %p299, %s298, 31
        %s301 = smul.addr %s300, 2
        %s302 = smul.addr %s301, 4
        %s303 = scalar_lea.vmem %s0, %s302
        %p304 = pneg %p44
        %p305 = pneg %p41
        %p306 = pneg %p65
        %p307 = pneg %p62
        %p308 = pneg %p86
        %p309 = pneg %p83
        %p310 = pneg %p107
        %p311 = pneg %p104
        %p312 = pneg %p128
        %p313 = pneg %p125
        %p314 = pneg %p149
        %p315 = pneg %p146
        %p316 = pneg %p170
        %p317 = pneg %p167
        %p318 = pneg %p191
        %p319 = pneg %p188
        %p320 = pneg %p212
        %p321 = pneg %p209
        %p322 = pneg %p238
        %p323 = pneg %p235
        %s324 = sand.u32 %s225, 1
        %s325 = scalar_lea.sflag [#allocation3], %s324
        %s326 = sand.u32 %s225, 1
        %s327 = smul.addr %s326, 256
        %s328 = scalar_lea.vmem [#allocation2], %s327
        %s329 = smul.u32 16, %s23
        %p330 = scmp.lt.s32.totalorder %s329, 31
        %s331 = scalar_select %p330, %s329, 31
        %s332 = smul.addr %s331, 2
        %s333 = smul.addr %s332, 4
        %s334 = scalar_lea.vmem %s0, %s333
        %s335 = smul.u32 16, %s23
        %s336 = smul.u32 16, %s23
        %v337 = vld [vmem:[%s334] sm:$0xff]
        %v338 = vld [vmem:[%s334 + $0x8] sm:$0xff]
        %v339 = vld [vmem:[%s334 + $0x10] sm:$0xff]
        %v340 = vld [vmem:[%s334 + $0x18] sm:$0xff]
        %v341 = vld [vmem:[%s334 + $0x20] sm:$0xff]
        %v342 = vld [vmem:[%s334 + $0x28] sm:$0xff]
        %v343 = vld [vmem:[%s334 + $0x30] sm:$0xff]
        %v344 = vld [vmem:[%s334 + $0x38] sm:$0xff]
        %v345 = vld [vmem:[%s334 + $0x40] sm:$0xff]
        %v346 = vld [vmem:[%s334 + $0x48] sm:$0xff]
        %v347 = vld [vmem:[%s334 + $0x50] sm:$0xff]
        %v348 = vld [vmem:[%s334 + $0x58] sm:$0xff]
        %v349 = vld [vmem:[%s334 + $0x60] sm:$0xff]
        %v350 = vld [vmem:[%s334 + $0x68] sm:$0xff]
        %v351 = vld [vmem:[%s334 + $0x70] sm:$0xff]
        %v352 = vld [vmem:[%s334 + $0x78] sm:$0xff]
        %v353 = vld [vmem:[%s2] sm:$0x1]
        %v354 = vld [vmem:[%s4] sm:$0x1]
        %v355 = vld [vmem:[%s6] sm:$0x1]
        %v356 = vld [vmem:[%s8] sm:$0x3]
        %v357 = vld [vmem:[%s1] sm:$0xf]
        %v358 = vld [vmem:[%s1 + $0x4] sm:$0xf]
        %v359 = vld [vmem:[%s1 + $0x8] sm:$0xf]
        %v360 = vld [vmem:[%s1 + $0xc] sm:$0xf]
        %v361 = vld [vmem:[%s1 + $0x10] sm:$0xf]
        %v362 = vld [vmem:[%s1 + $0x14] sm:$0xf]
        %v363 = vld [vmem:[%s1 + $0x18] sm:$0xf]
        %v364 = vld [vmem:[%s1 + $0x1c] sm:$0xf]
        %v365 = vld [vmem:[%s1 + $0x20] sm:$0xf]
        %v366 = vld [vmem:[%s1 + $0x24] sm:$0xf]
        %v367 = vld [vmem:[%s1 + $0x28] sm:$0xf]
        %v368 = vld [vmem:[%s1 + $0x2c] sm:$0xf]
        %v369 = vld [vmem:[%s1 + $0x30] sm:$0xf]
        %v370 = vld [vmem:[%s1 + $0x34] sm:$0xf]
        %v371 = vld [vmem:[%s1 + $0x38] sm:$0xf]
        %v372 = vld [vmem:[%s1 + $0x3c] sm:$0xf]
        %v373 = vld [vmem:[%s1 + $0x40] sm:$0xf]
        %v374 = vld [vmem:[%s1 + $0x44] sm:$0xf]
        %v375 = vld [vmem:[%s1 + $0x48] sm:$0xf]
        %v376 = vld [vmem:[%s1 + $0x4c] sm:$0xf]
        %v377 = vld [vmem:[%s1 + $0x50] sm:$0xf]
        %v378 = vld [vmem:[%s1 + $0x54] sm:$0xf]
        %v379 = vld [vmem:[%s1 + $0x58] sm:$0xf]
        %v380 = vld [vmem:[%s1 + $0x5c] sm:$0xf]
        %v381 = vld [vmem:[%s1 + $0x60] sm:$0xf]
        %v382 = vld [vmem:[%s1 + $0x64] sm:$0xf]
        %v383 = vld [vmem:[%s1 + $0x68] sm:$0xf]
        %v384 = vld [vmem:[%s1 + $0x6c] sm:$0xf]
        %v385 = vld [vmem:[%s1 + $0x70] sm:$0xf]
        %v386 = vld [vmem:[%s1 + $0x74] sm:$0xf]
        %v387 = vld [vmem:[%s1 + $0x78] sm:$0xf]
        %v388 = vld [vmem:[%s1 + $0x7c] sm:$0xf]
        %v390 = vperm.slane %v353, 0
        %v408 = vunpack.c.l.b16 %v337
        %v409 = vunpack.c.h.b16 %v337
        %v410 = vunpack.c.l.b16 %v338
        %v411 = vunpack.c.h.b16 %v338
        %v412 = vunpack.c.l.b16 %v339
        %v413 = vunpack.c.h.b16 %v339
        %v414 = vunpack.c.l.b16 %v340
        %v415 = vunpack.c.h.b16 %v340
        %v416 = vunpack.c.l.b16 %v341
        %v417 = vunpack.c.h.b16 %v341
        %v418 = vunpack.c.l.b16 %v342
        %v419 = vunpack.c.h.b16 %v342
        %v420 = vunpack.c.l.b16 %v343
        %v421 = vunpack.c.h.b16 %v343
        %v422 = vunpack.c.l.b16 %v344
        %v423 = vunpack.c.h.b16 %v344
        %v424 = vunpack.c.l.b16 %v345
        %v425 = vunpack.c.h.b16 %v345
        %v426 = vunpack.c.l.b16 %v346
        %v427 = vunpack.c.h.b16 %v346
        %v428 = vunpack.c.l.b16 %v347
        %v429 = vunpack.c.h.b16 %v347
        %v430 = vunpack.c.l.b16 %v348
        %v431 = vunpack.c.h.b16 %v348
        %v432 = vunpack.c.l.b16 %v349
        %v433 = vunpack.c.h.b16 %v349
        %v434 = vunpack.c.l.b16 %v350
        %v435 = vunpack.c.h.b16 %v350
        %v436 = vunpack.c.l.b16 %v351
        %v437 = vunpack.c.h.b16 %v351
        %v438 = vunpack.c.l.b16 %v352
        %v439 = vunpack.c.h.b16 %v352
        %v440 = vpack.c.b16 %v410, %v408
        %v441 = vpack.c.b16 %v411, %v409
        %v442 = vpack.c.b16 %v414, %v412
        %v443 = vpack.c.b16 %v415, %v413
        %v444 = vpack.c.b16 %v418, %v416
        %v445 = vpack.c.b16 %v419, %v417
        %v446 = vpack.c.b16 %v422, %v420
        %v447 = vpack.c.b16 %v423, %v421
        %v448 = vpack.c.b16 %v426, %v424
        %v449 = vpack.c.b16 %v427, %v425
        %v450 = vpack.c.b16 %v430, %v428
        %v451 = vpack.c.b16 %v431, %v429
        %v452 = vpack.c.b16 %v434, %v432
        %v453 = vpack.c.b16 %v435, %v433
        %v454 = vpack.c.b16 %v438, %v436
        %v455 = vpack.c.b16 %v439, %v437
        %v504 = vunpack.c.l.b16 %v357
        %v505 = vunpack.c.l.b16 %v358
        %v506 = vunpack.c.l.b16 %v359
        %v507 = vunpack.c.l.b16 %v360
        %v508 = vunpack.c.l.b16 %v361
        %v509 = vunpack.c.l.b16 %v362
        %v510 = vunpack.c.l.b16 %v363
        %v511 = vunpack.c.l.b16 %v364
        %v512 = vunpack.c.l.b16 %v365
        %v513 = vunpack.c.l.b16 %v366
        %v514 = vunpack.c.l.b16 %v367
        %v515 = vunpack.c.l.b16 %v368
        %v516 = vunpack.c.l.b16 %v369
        %v517 = vunpack.c.l.b16 %v370
        %v518 = vunpack.c.l.b16 %v371
        %v519 = vunpack.c.l.b16 %v372
        %v520 = vunpack.c.l.b16 %v373
        %v521 = vunpack.c.l.b16 %v374
        %v522 = vunpack.c.l.b16 %v375
        %v523 = vunpack.c.l.b16 %v376
        %v524 = vunpack.c.l.b16 %v377
        %v525 = vunpack.c.l.b16 %v378
        %v526 = vunpack.c.l.b16 %v379
        %v527 = vunpack.c.l.b16 %v380
        %v528 = vunpack.c.l.b16 %v381
        %v529 = vunpack.c.l.b16 %v382
        %v530 = vunpack.c.l.b16 %v383
        %v531 = vunpack.c.l.b16 %v384
        %v532 = vunpack.c.l.b16 %v385
        %v533 = vunpack.c.l.b16 %v386
        %v534 = vunpack.c.l.b16 %v387
        %v535 = vunpack.c.l.b16 %v388
        %v536 = vpack.c.b16 %v505, %v504
        %v537 = vpack.c.b16 %v507, %v506
        %v538 = vpack.c.b16 %v509, %v508
        %v539 = vpack.c.b16 %v511, %v510
        %v540 = vpack.c.b16 %v513, %v512
        %v541 = vpack.c.b16 %v515, %v514
        %v542 = vpack.c.b16 %v517, %v516
        %v543 = vpack.c.b16 %v519, %v518
        %v544 = vpack.c.b16 %v521, %v520
        %v545 = vpack.c.b16 %v523, %v522
        %v546 = vpack.c.b16 %v525, %v524
        %v547 = vpack.c.b16 %v527, %v526
        %v548 = vpack.c.b16 %v529, %v528
        %v549 = vpack.c.b16 %v531, %v530
        %v550 = vpack.c.b16 %v533, %v532
        %v551 = vpack.c.b16 %v535, %v534
        %568 = vmatpush.bf16.msra.mxu0 %v543
        %569 = vmatpush.bf16.msra.mxu0 %v542
        %570 = vmatpush.bf16.msra.mxu0 %v541
        %571 = vmatpush.bf16.msra.mxu0 %v540
        %572 = vmatpush.bf16.msra.mxu0 %v539
        %573 = vmatpush.bf16.msra.mxu0 %v538
        %574 = vmatpush.bf16.msra.mxu0 %v537
        %575 = vmatpush.bf16.msra.mxu0 %v536
        %576 = vmatmul.bf16.gmra.mxu0 %v440
        %v577 = vpop.f32.mrf.mxu0
        %v578 = vadd.f32 %v390, %v577
        %v579 = vpop.f32.mrf.mxu0
        %v580 = vadd.f32 %v390, %v579
        %581 = vmatmul.bf16.gmra.mxu0 %v442
        %v582 = vpop.f32.mrf.mxu0
        %v583 = vadd.f32 %v390, %v582
        %v584 = vpop.f32.mrf.mxu0
        %v585 = vadd.f32 %v390, %v584
        %586 = vmatmul.bf16.gmra.mxu0 %v444
        %v587 = vpop.f32.mrf.mxu0
        %v588 = vadd.f32 %v390, %v587
        %v589 = vpop.f32.mrf.mxu0
        %v590 = vadd.f32 %v390, %v589
        %591 = vmatmul.bf16.gmra.mxu0 %v446
        %v592 = vpop.f32.mrf.mxu0
        %v593 = vadd.f32 %v390, %v592
        %v594 = vpop.f32.mrf.mxu0
        %v595 = vadd.f32 %v390, %v594
        %596 = vmatmul.bf16.gmra.mxu0 %v448
        %v597 = vpop.f32.mrf.mxu0
        %v598 = vadd.f32 %v390, %v597
        %v599 = vpop.f32.mrf.mxu0
        %v600 = vadd.f32 %v390, %v599
        %601 = vmatmul.bf16.gmra.mxu0 %v450
        %v602 = vpop.f32.mrf.mxu0
        %v603 = vadd.f32 %v390, %v602
        %v604 = vpop.f32.mrf.mxu0
        %v605 = vadd.f32 %v390, %v604
        %606 = vmatmul.bf16.gmra.mxu0 %v452
        %v607 = vpop.f32.mrf.mxu0
        %v608 = vadd.f32 %v390, %v607
        %v609 = vpop.f32.mrf.mxu0
        %v610 = vadd.f32 %v390, %v609
        %611 = vmatmul.bf16.gmra.mxu0 %v454
        %v612 = vpop.f32.mrf.mxu0
        %v613 = vadd.f32 %v390, %v612
        %v614 = vpop.f32.mrf.mxu0
        %v615 = vadd.f32 %v390, %v614
        %616 = vdwg.mxu0
        %617 = vmatpush.bf16.msra.mxu0 %v551
        %618 = vmatpush.bf16.msra.mxu0 %v550
        %619 = vmatpush.bf16.msra.mxu0 %v549
        %620 = vmatpush.bf16.msra.mxu0 %v548
        %621 = vmatpush.bf16.msra.mxu0 %v547
        %622 = vmatpush.bf16.msra.mxu0 %v546
        %623 = vmatpush.bf16.msra.mxu0 %v545
        %624 = vmatpush.bf16.msra.mxu0 %v544
        %625 = vmatmul.bf16.gmra.mxu0 %v441
        %v626 = vpop.f32.mrf.mxu0
        %v627 = vadd.f32 %v578, %v626
        %v628 = vpop.f32.mrf.mxu0
        %v629 = vadd.f32 %v580, %v628
        %630 = vmatmul.bf16.gmra.mxu0 %v443
        %v631 = vpop.f32.mrf.mxu0
        %v632 = vadd.f32 %v583, %v631
        %v633 = vpop.f32.mrf.mxu0
        %v634 = vadd.f32 %v585, %v633
        %635 = vmatmul.bf16.gmra.mxu0 %v445
        %v636 = vpop.f32.mrf.mxu0
        %v637 = vadd.f32 %v588, %v636
        %v638 = vpop.f32.mrf.mxu0
        %v639 = vadd.f32 %v590, %v638
        %640 = vmatmul.bf16.gmra.mxu0 %v447
        %v641 = vpop.f32.mrf.mxu0
        %v642 = vadd.f32 %v593, %v641
        %v643 = vpop.f32.mrf.mxu0
        %v644 = vadd.f32 %v595, %v643
        %645 = vmatmul.bf16.gmra.mxu0 %v449
        %v646 = vpop.f32.mrf.mxu0
        %v647 = vadd.f32 %v598, %v646
        %v648 = vpop.f32.mrf.mxu0
        %v649 = vadd.f32 %v600, %v648
        %650 = vmatmul.bf16.gmra.mxu0 %v451
        %v651 = vpop.f32.mrf.mxu0
        %v652 = vadd.f32 %v603, %v651
        %v653 = vpop.f32.mrf.mxu0
        %v654 = vadd.f32 %v605, %v653
        %655 = vmatmul.bf16.gmra.mxu0 %v453
        %v656 = vpop.f32.mrf.mxu0
        %v657 = vadd.f32 %v608, %v656
        %v658 = vpop.f32.mrf.mxu0
        %v659 = vadd.f32 %v610, %v658
        %660 = vmatmul.bf16.gmra.mxu0 %v455
        %v661 = vpop.f32.mrf.mxu0
        %v662 = vadd.f32 %v613, %v661
        %v663 = vpop.f32.mrf.mxu0
        %v664 = vadd.f32 %v615, %v663
        %665 = vdwg.mxu0
        %v666 = vmax.f32 %v627, 0.0
        %v667 = vmax.f32 %v629, 0.0
        %v668 = vmax.f32 %v632, 0.0
        %v669 = vmax.f32 %v634, 0.0
        %v670 = vmax.f32 %v637, 0.0
        %v671 = vmax.f32 %v639, 0.0
        %v672 = vmax.f32 %v642, 0.0
        %v673 = vmax.f32 %v644, 0.0
        %v674 = vmax.f32 %v647, 0.0
        %v675 = vmax.f32 %v649, 0.0
        %v676 = vmax.f32 %v652, 0.0
        %v677 = vmax.f32 %v654, 0.0
        %v678 = vmax.f32 %v657, 0.0
        %v679 = vmax.f32 %v659, 0.0
        %v680 = vmax.f32 %v662, 0.0
        %v681 = vmax.f32 %v664, 0.0
        %v682 = vpack.c.bf16 %v667, %v666
        %v683 = vpack.c.bf16 %v669, %v668
        %v684 = vpack.c.bf16 %v671, %v670
        %v685 = vpack.c.bf16 %v673, %v672
        %v686 = vpack.c.bf16 %v675, %v674
        %v687 = vpack.c.bf16 %v677, %v676
        %v688 = vpack.c.bf16 %v679, %v678
        %v689 = vpack.c.bf16 %v681, %v680
        %v690 = vld [vmem:[%s3] sm:$0xf]
        %v691 = vld [vmem:[%s3 + $0x4] sm:$0xf]
        %v692 = vld [vmem:[%s3 + $0x8] sm:$0xf]
        %v693 = vld [vmem:[%s3 + $0xc] sm:$0xf]
        %v694 = vld [vmem:[%s3 + $0x10] sm:$0xf]
        %v695 = vld [vmem:[%s3 + $0x14] sm:$0xf]
        %v696 = vld [vmem:[%s3 + $0x18] sm:$0xf]
        %v697 = vld [vmem:[%s3 + $0x1c] sm:$0xf]
        %v698 = vld [vmem:[%s3 + $0x20] sm:$0xf]
        %v699 = vld [vmem:[%s3 + $0x24] sm:$0xf]
        %v700 = vld [vmem:[%s3 + $0x28] sm:$0xf]
        %v701 = vld [vmem:[%s3 + $0x2c] sm:$0xf]
        %v702 = vld [vmem:[%s3 + $0x30] sm:$0xf]
        %v703 = vld [vmem:[%s3 + $0x34] sm:$0xf]
        %v704 = vld [vmem:[%s3 + $0x38] sm:$0xf]
        %v705 = vld [vmem:[%s3 + $0x3c] sm:$0xf]
        %v707 = vperm.slane %v354, 0
        %v725 = vunpack.c.l.b16 %v690
        %v726 = vunpack.c.l.b16 %v691
        %v727 = vunpack.c.l.b16 %v692
        %v728 = vunpack.c.l.b16 %v693
        %v729 = vunpack.c.l.b16 %v694
        %v730 = vunpack.c.l.b16 %v695
        %v731 = vunpack.c.l.b16 %v696
        %v732 = vunpack.c.l.b16 %v697
        %v733 = vunpack.c.l.b16 %v698
        %v734 = vunpack.c.l.b16 %v699
        %v735 = vunpack.c.l.b16 %v700
        %v736 = vunpack.c.l.b16 %v701
        %v737 = vunpack.c.l.b16 %v702
        %v738 = vunpack.c.l.b16 %v703
        %v739 = vunpack.c.l.b16 %v704
        %v740 = vunpack.c.l.b16 %v705
        %v741 = vpack.c.b16 %v726, %v725
        %v742 = vpack.c.b16 %v728, %v727
        %v743 = vpack.c.b16 %v730, %v729
        %v744 = vpack.c.b16 %v732, %v731
        %v745 = vpack.c.b16 %v734, %v733
        %v746 = vpack.c.b16 %v736, %v735
        %v747 = vpack.c.b16 %v738, %v737
        %v748 = vpack.c.b16 %v740, %v739
        %757 = vmatpush.bf16.msra.mxu0 %v748
        %758 = vmatpush.bf16.msra.mxu0 %v747
        %759 = vmatpush.bf16.msra.mxu0 %v746
        %760 = vmatpush.bf16.msra.mxu0 %v745
        %761 = vmatpush.bf16.msra.mxu0 %v744
        %762 = vmatpush.bf16.msra.mxu0 %v743
        %763 = vmatpush.bf16.msra.mxu0 %v742
        %764 = vmatpush.bf16.msra.mxu0 %v741
        %765 = vmatmul.bf16.gmra.mxu0 %v682
        %v766 = vpop.f32.mrf.mxu0
        %v767 = vadd.f32 %v707, %v766
        %v768 = vpop.f32.mrf.mxu0
        %v769 = vadd.f32 %v707, %v768
        %770 = vmatmul.bf16.gmra.mxu0 %v683
        %v771 = vpop.f32.mrf.mxu0
        %v772 = vadd.f32 %v707, %v771
        %v773 = vpop.f32.mrf.mxu0
        %v774 = vadd.f32 %v707, %v773
        %775 = vmatmul.bf16.gmra.mxu0 %v684
        %v776 = vpop.f32.mrf.mxu0
        %v777 = vadd.f32 %v707, %v776
        %v778 = vpop.f32.mrf.mxu0
        %v779 = vadd.f32 %v707, %v778
        %780 = vmatmul.bf16.gmra.mxu0 %v685
        %v781 = vpop.f32.mrf.mxu0
        %v782 = vadd.f32 %v707, %v781
        %v783 = vpop.f32.mrf.mxu0
        %v784 = vadd.f32 %v707, %v783
        %785 = vmatmul.bf16.gmra.mxu0 %v686
        %v786 = vpop.f32.mrf.mxu0
        %v787 = vadd.f32 %v707, %v786
        %v788 = vpop.f32.mrf.mxu0
        %v789 = vadd.f32 %v707, %v788
        %790 = vmatmul.bf16.gmra.mxu0 %v687
        %v791 = vpop.f32.mrf.mxu0
        %v792 = vadd.f32 %v707, %v791
        %v793 = vpop.f32.mrf.mxu0
        %v794 = vadd.f32 %v707, %v793
        %795 = vmatmul.bf16.gmra.mxu0 %v688
        %v796 = vpop.f32.mrf.mxu0
        %v797 = vadd.f32 %v707, %v796
        %v798 = vpop.f32.mrf.mxu0
        %v799 = vadd.f32 %v707, %v798
        %800 = vmatmul.bf16.gmra.mxu0 %v689
        %v801 = vpop.f32.mrf.mxu0
        %v802 = vadd.f32 %v707, %v801
        %v803 = vpop.f32.mrf.mxu0
        %v804 = vadd.f32 %v707, %v803
        %805 = vdwg.mxu0
        %v806 = vpack.c.bf16 %v769, %v767
        %v807 = vpack.c.bf16 %v774, %v772
        %v808 = vpack.c.bf16 %v779, %v777
        %v809 = vpack.c.bf16 %v784, %v782
        %v810 = vpack.c.bf16 %v789, %v787
        %v811 = vpack.c.bf16 %v794, %v792
        %v812 = vpack.c.bf16 %v799, %v797
        %v813 = vpack.c.bf16 %v804, %v802
        %v814 = vld [vmem:[%s5] sm:$0xf]
        %v815 = vld [vmem:[%s5 + $0x4] sm:$0xf]
        %v816 = vld [vmem:[%s5 + $0x8] sm:$0xf]
        %v817 = vld [vmem:[%s5 + $0xc] sm:$0xf]
        %v818 = vld [vmem:[%s5 + $0x10] sm:$0xf]
        %v819 = vld [vmem:[%s5 + $0x14] sm:$0xf]
        %v820 = vld [vmem:[%s5 + $0x18] sm:$0xf]
        %v821 = vld [vmem:[%s5 + $0x1c] sm:$0xf]
        %v822 = vld [vmem:[%s5 + $0x20] sm:$0xf]
        %v823 = vld [vmem:[%s5 + $0x24] sm:$0xf]
        %v824 = vld [vmem:[%s5 + $0x28] sm:$0xf]
        %v825 = vld [vmem:[%s5 + $0x2c] sm:$0xf]
        %v826 = vld [vmem:[%s5 + $0x30] sm:$0xf]
        %v827 = vld [vmem:[%s5 + $0x34] sm:$0xf]
        %v828 = vld [vmem:[%s5 + $0x38] sm:$0xf]
        %v829 = vld [vmem:[%s5 + $0x3c] sm:$0xf]
        %v831 = vperm.slane %v355, 0
        %v849 = vunpack.c.l.b16 %v814
        %v850 = vunpack.c.l.b16 %v815
        %v851 = vunpack.c.l.b16 %v816
        %v852 = vunpack.c.l.b16 %v817
        %v853 = vunpack.c.l.b16 %v818
        %v854 = vunpack.c.l.b16 %v819
        %v855 = vunpack.c.l.b16 %v820
        %v856 = vunpack.c.l.b16 %v821
        %v857 = vunpack.c.l.b16 %v822
        %v858 = vunpack.c.l.b16 %v823
        %v859 = vunpack.c.l.b16 %v824
        %v860 = vunpack.c.l.b16 %v825
        %v861 = vunpack.c.l.b16 %v826
        %v862 = vunpack.c.l.b16 %v827
        %v863 = vunpack.c.l.b16 %v828
        %v864 = vunpack.c.l.b16 %v829
        %v865 = vpack.c.b16 %v850, %v849
        %v866 = vpack.c.b16 %v852, %v851
        %v867 = vpack.c.b16 %v854, %v853
        %v868 = vpack.c.b16 %v856, %v855
        %v869 = vpack.c.b16 %v858, %v857
        %v870 = vpack.c.b16 %v860, %v859
        %v871 = vpack.c.b16 %v862, %v861
        %v872 = vpack.c.b16 %v864, %v863
        %881 = vmatpush.bf16.msra.mxu0 %v872
        %882 = vmatpush.bf16.msra.mxu0 %v871
        %883 = vmatpush.bf16.msra.mxu0 %v870
        %884 = vmatpush.bf16.msra.mxu0 %v869
        %885 = vmatpush.bf16.msra.mxu0 %v868
        %886 = vmatpush.bf16.msra.mxu0 %v867
        %887 = vmatpush.bf16.msra.mxu0 %v866
        %888 = vmatpush.bf16.msra.mxu0 %v865
        %889 = vmatmul.bf16.gmra.mxu0 %v806
        %v890 = vpop.f32.mrf.mxu0
        %v891 = vadd.f32 %v831, %v890
        %v892 = vpop.f32.mrf.mxu0
        %v893 = vadd.f32 %v831, %v892
        %894 = vmatmul.bf16.gmra.mxu0 %v807
        %v895 = vpop.f32.mrf.mxu0
        %v896 = vadd.f32 %v831, %v895
        %v897 = vpop.f32.mrf.mxu0
        %v898 = vadd.f32 %v831, %v897
        %899 = vmatmul.bf16.gmra.mxu0 %v808
        %v900 = vpop.f32.mrf.mxu0
        %v901 = vadd.f32 %v831, %v900
        %v902 = vpop.f32.mrf.mxu0
        %v903 = vadd.f32 %v831, %v902
        %904 = vmatmul.bf16.gmra.mxu0 %v809
        %v905 = vpop.f32.mrf.mxu0
        %v906 = vadd.f32 %v831, %v905
        %v907 = vpop.f32.mrf.mxu0
        %v908 = vadd.f32 %v831, %v907
        %909 = vmatmul.bf16.gmra.mxu0 %v810
        %v910 = vpop.f32.mrf.mxu0
        %v911 = vadd.f32 %v831, %v910
        %v912 = vpop.f32.mrf.mxu0
        %v913 = vadd.f32 %v831, %v912
        %914 = vmatmul.bf16.gmra.mxu0 %v811
        %v915 = vpop.f32.mrf.mxu0
        %v916 = vadd.f32 %v831, %v915
        %v917 = vpop.f32.mrf.mxu0
        %v918 = vadd.f32 %v831, %v917
        %919 = vmatmul.bf16.gmra.mxu0 %v812
        %v920 = vpop.f32.mrf.mxu0
        %v921 = vadd.f32 %v831, %v920
        %v922 = vpop.f32.mrf.mxu0
        %v923 = vadd.f32 %v831, %v922
        %924 = vmatmul.bf16.gmra.mxu0 %v813
        %v925 = vpop.f32.mrf.mxu0
        %v926 = vadd.f32 %v831, %v925
        %v927 = vpop.f32.mrf.mxu0
        %v928 = vadd.f32 %v831, %v927
        %929 = vdwg.mxu0
        %v930 = vmax.f32 %v891, 0.0
        %v931 = vmax.f32 %v893, 0.0
        %v932 = vmax.f32 %v896, 0.0
        %v933 = vmax.f32 %v898, 0.0
        %v934 = vmax.f32 %v901, 0.0
        %v935 = vmax.f32 %v903, 0.0
        %v936 = vmax.f32 %v906, 0.0
        %v937 = vmax.f32 %v908, 0.0
        %v938 = vmax.f32 %v911, 0.0
        %v939 = vmax.f32 %v913, 0.0
        %v940 = vmax.f32 %v916, 0.0
        %v941 = vmax.f32 %v918, 0.0
        %v942 = vmax.f32 %v921, 0.0
        %v943 = vmax.f32 %v923, 0.0
        %v944 = vmax.f32 %v926, 0.0
        %v945 = vmax.f32 %v928, 0.0
        %v946 = vpack.c.bf16 %v931, %v930
        %v947 = vpack.c.bf16 %v933, %v932
        %v948 = vpack.c.bf16 %v935, %v934
        %v949 = vpack.c.bf16 %v937, %v936
        %v950 = vpack.c.bf16 %v939, %v938
        %v951 = vpack.c.bf16 %v941, %v940
        %v952 = vpack.c.bf16 %v943, %v942
        %v953 = vpack.c.bf16 %v945, %v944
        %v954 = vld [vmem:[%s7] sm:$0xff]
        %v955 = vld [vmem:[%s7 + $0x8] sm:$0xff]
        %v956 = vld [vmem:[%s7 + $0x10] sm:$0xff]
        %v957 = vld [vmem:[%s7 + $0x18] sm:$0xff]
        %v958 = vld [vmem:[%s7 + $0x20] sm:$0xff]
        %v959 = vld [vmem:[%s7 + $0x28] sm:$0xff]
        %v960 = vld [vmem:[%s7 + $0x30] sm:$0xff]
        %v961 = vld [vmem:[%s7 + $0x38] sm:$0xff]
        %v962 = vld [vmem:[%s7 + $0x40] sm:$0xff]
        %v963 = vld [vmem:[%s7 + $0x48] sm:$0xff]
        %v964 = vld [vmem:[%s7 + $0x50] sm:$0xff]
        %v965 = vld [vmem:[%s7 + $0x58] sm:$0xff]
        %v966 = vld [vmem:[%s7 + $0x60] sm:$0xff]
        %v967 = vld [vmem:[%s7 + $0x68] sm:$0xff]
        %v968 = vld [vmem:[%s7 + $0x70] sm:$0xff]
        %v969 = vld [vmem:[%s7 + $0x78] sm:$0xff]
        %v971 = vperm.slane %v356, 0
        %v972 = vperm.slane %v356, 1
        %v991 = vunpack.c.l.b16 %v954
        %v992 = vunpack.c.h.b16 %v954
        %v993 = vunpack.c.l.b16 %v955
        %v994 = vunpack.c.h.b16 %v955
        %v995 = vunpack.c.l.b16 %v956
        %v996 = vunpack.c.h.b16 %v956
        %v997 = vunpack.c.l.b16 %v957
        %v998 = vunpack.c.h.b16 %v957
        %v999 = vunpack.c.l.b16 %v958
        %v1000 = vunpack.c.h.b16 %v958
        %v1001 = vunpack.c.l.b16 %v959
        %v1002 = vunpack.c.h.b16 %v959
        %v1003 = vunpack.c.l.b16 %v960
        %v1004 = vunpack.c.h.b16 %v960
        %v1005 = vunpack.c.l.b16 %v961
        %v1006 = vunpack.c.h.b16 %v961
        %v1007 = vunpack.c.l.b16 %v962
        %v1008 = vunpack.c.h.b16 %v962
        %v1009 = vunpack.c.l.b16 %v963
        %v1010 = vunpack.c.h.b16 %v963
        %v1011 = vunpack.c.l.b16 %v964
        %v1012 = vunpack.c.h.b16 %v964
        %v1013 = vunpack.c.l.b16 %v965
        %v1014 = vunpack.c.h.b16 %v965
        %v1015 = vunpack.c.l.b16 %v966
        %v1016 = vunpack.c.h.b16 %v966
        %v1017 = vunpack.c.l.b16 %v967
        %v1018 = vunpack.c.h.b16 %v967
        %v1019 = vunpack.c.l.b16 %v968
        %v1020 = vunpack.c.h.b16 %v968
        %v1021 = vunpack.c.l.b16 %v969
        %v1022 = vunpack.c.h.b16 %v969
        %v1023 = vpack.c.b16 %v993, %v991
        %v1024 = vpack.c.b16 %v994, %v992
        %v1025 = vpack.c.b16 %v997, %v995
        %v1026 = vpack.c.b16 %v998, %v996
        %v1027 = vpack.c.b16 %v1001, %v999
        %v1028 = vpack.c.b16 %v1002, %v1000
        %v1029 = vpack.c.b16 %v1005, %v1003
        %v1030 = vpack.c.b16 %v1006, %v1004
        %v1031 = vpack.c.b16 %v1009, %v1007
        %v1032 = vpack.c.b16 %v1010, %v1008
        %v1033 = vpack.c.b16 %v1013, %v1011
        %v1034 = vpack.c.b16 %v1014, %v1012
        %v1035 = vpack.c.b16 %v1017, %v1015
        %v1036 = vpack.c.b16 %v1018, %v1016
        %v1037 = vpack.c.b16 %v1021, %v1019
        %v1038 = vpack.c.b16 %v1022, %v1020
        %1055 = vmatpush.bf16.msra.mxu0 %v1037
        %1056 = vmatpush.bf16.msra.mxu0 %v1035
        %1057 = vmatpush.bf16.msra.mxu0 %v1033
        %1058 = vmatpush.bf16.msra.mxu0 %v1031
        %1059 = vmatpush.bf16.msra.mxu0 %v1029
        %1060 = vmatpush.bf16.msra.mxu0 %v1027
        %1061 = vmatpush.bf16.msra.mxu0 %v1025
        %1062 = vmatpush.bf16.msra.mxu0 %v1023
        %1063 = vmatmul.bf16.gmra.mxu0 %v946
        %v1064 = vpop.f32.mrf.mxu0
        %v1065 = vadd.f32 %v971, %v1064
        %v1066 = vpop.f32.mrf.mxu0
        %v1067 = vadd.f32 %v971, %v1066
        %1068 = vmatmul.bf16.gmra.mxu0 %v947
        %v1069 = vpop.f32.mrf.mxu0
        %v1070 = vadd.f32 %v971, %v1069
        %v1071 = vpop.f32.mrf.mxu0
        %v1072 = vadd.f32 %v971, %v1071
        %1073 = vmatmul.bf16.gmra.mxu0 %v948
        %v1074 = vpop.f32.mrf.mxu0
        %v1075 = vadd.f32 %v971, %v1074
        %v1076 = vpop.f32.mrf.mxu0
        %v1077 = vadd.f32 %v971, %v1076
        %1078 = vmatmul.bf16.gmra.mxu0 %v949
        %v1079 = vpop.f32.mrf.mxu0
        %v1080 = vadd.f32 %v971, %v1079
        %v1081 = vpop.f32.mrf.mxu0
        %v1082 = vadd.f32 %v971, %v1081
        %1083 = vmatmul.bf16.gmra.mxu0 %v950
        %v1084 = vpop.f32.mrf.mxu0
        %v1085 = vadd.f32 %v971, %v1084
        %v1086 = vpop.f32.mrf.mxu0
        %v1087 = vadd.f32 %v971, %v1086
        %1088 = vmatmul.bf16.gmra.mxu0 %v951
        %v1089 = vpop.f32.mrf.mxu0
        %v1090 = vadd.f32 %v971, %v1089
        %v1091 = vpop.f32.mrf.mxu0
        %v1092 = vadd.f32 %v971, %v1091
        %1093 = vmatmul.bf16.gmra.mxu0 %v952
        %v1094 = vpop.f32.mrf.mxu0
        %v1095 = vadd.f32 %v971, %v1094
        %v1096 = vpop.f32.mrf.mxu0
        %v1097 = vadd.f32 %v971, %v1096
        %1098 = vmatmul.bf16.gmra.mxu0 %v953
        %v1099 = vpop.f32.mrf.mxu0
        %v1100 = vadd.f32 %v971, %v1099
        %v1101 = vpop.f32.mrf.mxu0
        %v1102 = vadd.f32 %v971, %v1101
        %1103 = vdwg.mxu0
        %1104 = vmatpush.bf16.msra.mxu0 %v1038
        %1105 = vmatpush.bf16.msra.mxu0 %v1036
        %1106 = vmatpush.bf16.msra.mxu0 %v1034
        %1107 = vmatpush.bf16.msra.mxu0 %v1032
        %1108 = vmatpush.bf16.msra.mxu0 %v1030
        %1109 = vmatpush.bf16.msra.mxu0 %v1028
        %1110 = vmatpush.bf16.msra.mxu0 %v1026
        %1111 = vmatpush.bf16.msra.mxu0 %v1024
        %1112 = vmatmul.bf16.gmra.mxu0 %v946
        %v1113 = vpop.f32.mrf.mxu0
        %v1114 = vadd.f32 %v972, %v1113
        %v1115 = vpop.f32.mrf.mxu0
        %v1116 = vadd.f32 %v972, %v1115
        %1117 = vmatmul.bf16.gmra.mxu0 %v947
        %v1118 = vpop.f32.mrf.mxu0
        %v1119 = vadd.f32 %v972, %v1118
        %v1120 = vpop.f32.mrf.mxu0
        %v1121 = vadd.f32 %v972, %v1120
        %1122 = vmatmul.bf16.gmra.mxu0 %v948
        %v1123 = vpop.f32.mrf.mxu0
        %v1124 = vadd.f32 %v972, %v1123
        %v1125 = vpop.f32.mrf.mxu0
        %v1126 = vadd.f32 %v972, %v1125
        %1127 = vmatmul.bf16.gmra.mxu0 %v949
        %v1128 = vpop.f32.mrf.mxu0
        %v1129 = vadd.f32 %v972, %v1128
        %v1130 = vpop.f32.mrf.mxu0
        %v1131 = vadd.f32 %v972, %v1130
        %1132 = vmatmul.bf16.gmra.mxu0 %v950
        %v1133 = vpop.f32.mrf.mxu0
        %v1134 = vadd.f32 %v972, %v1133
        %v1135 = vpop.f32.mrf.mxu0
        %v1136 = vadd.f32 %v972, %v1135
        %1137 = vmatmul.bf16.gmra.mxu0 %v951
        %v1138 = vpop.f32.mrf.mxu0
        %v1139 = vadd.f32 %v972, %v1138
        %v1140 = vpop.f32.mrf.mxu0
        %v1141 = vadd.f32 %v972, %v1140
        %1142 = vmatmul.bf16.gmra.mxu0 %v952
        %v1143 = vpop.f32.mrf.mxu0
        %v1144 = vadd.f32 %v972, %v1143
        %v1145 = vpop.f32.mrf.mxu0
        %v1146 = vadd.f32 %v972, %v1145
        %1147 = vmatmul.bf16.gmra.mxu0 %v953
        %v1148 = vpop.f32.mrf.mxu0
        %v1149 = vadd.f32 %v972, %v1148
        %v1150 = vpop.f32.mrf.mxu0
        %v1151 = vadd.f32 %v972, %v1150
        %1152 = vdwg.mxu0
        %1153 = vst [vmem:[%s328] sm:$0xff] %v1065
        %1154 = vst [vmem:[%s328 + $0x8] sm:$0xff] %v1114
        %1155 = vst [vmem:[%s328 + $0x10] sm:$0xff] %v1067
        %1156 = vst [vmem:[%s328 + $0x18] sm:$0xff] %v1116
        %1157 = vst [vmem:[%s328 + $0x20] sm:$0xff] %v1070
        %1158 = vst [vmem:[%s328 + $0x28] sm:$0xff] %v1119
        %1159 = vst [vmem:[%s328 + $0x30] sm:$0xff] %v1072
        %1160 = vst [vmem:[%s328 + $0x38] sm:$0xff] %v1121
        %1161 = vst [vmem:[%s328 + $0x40] sm:$0xff] %v1075
        %1162 = vst [vmem:[%s328 + $0x48] sm:$0xff] %v1124
        %1163 = vst [vmem:[%s328 + $0x50] sm:$0xff] %v1077
        %1164 = vst [vmem:[%s328 + $0x58] sm:$0xff] %v1126
        %1165 = vst [vmem:[%s328 + $0x60] sm:$0xff] %v1080
        %1166 = vst [vmem:[%s328 + $0x68] sm:$0xff] %v1129
        %1167 = vst [vmem:[%s328 + $0x70] sm:$0xff] %v1082
        %1168 = vst [vmem:[%s328 + $0x78] sm:$0xff] %v1131
        %1169 = vst [vmem:[%s328 + $0x80] sm:$0xff] %v1085
        %1170 = vst [vmem:[%s328 + $0x88] sm:$0xff] %v1134
        %1171 = vst [vmem:[%s328 + $0x90] sm:$0xff] %v1087
        %1172 = vst [vmem:[%s328 + $0x98] sm:$0xff] %v1136
        %1173 = vst [vmem:[%s328 + $0xa0] sm:$0xff] %v1090
        %1174 = vst [vmem:[%s328 + $0xa8] sm:$0xff] %v1139
        %1175 = vst [vmem:[%s328 + $0xb0] sm:$0xff] %v1092
        %1176 = vst [vmem:[%s328 + $0xb8] sm:$0xff] %v1141
        %1177 = vst [vmem:[%s328 + $0xc0] sm:$0xff] %v1095
        %1178 = vst [vmem:[%s328 + $0xc8] sm:$0xff] %v1144
        %1179 = vst [vmem:[%s328 + $0xd0] sm:$0xff] %v1097
        %1180 = vst [vmem:[%s328 + $0xd8] sm:$0xff] %v1146
        %1181 = vst [vmem:[%s328 + $0xe0] sm:$0xff] %v1100
        %1182 = vst [vmem:[%s328 + $0xe8] sm:$0xff] %v1149
        %1183 = vst [vmem:[%s328 + $0xf0] sm:$0xff] %v1102
        %1184 = vst [vmem:[%s328 + $0xf8] sm:$0xff] %v1151
        %s1185 = sand.u32 %s225, 1
        %s1186 = scalar_lea.sflag [#allocation3], %s1185
        %s1187 = sand.u32 %s225, 1
        %s1188 = smul.addr %s1187, 256
        %s1189 = scalar_lea.vmem [#allocation2], %s1188
        // Predicated region
        $region57: #{autoencoder_forward.1} parent=55 // pred_check
          %p1190 = pneg %p235
        $region58: #{autoencoder_forward.1} parent=55 // pred_check_branch
          %1192 = sbr.rel (%p1190) target = $region60
        $region59: #{autoencoder_forward.1} parent=55 // pred_region
          %s1193 = smul.u32 16, %s23
          %1195 = vsyncadd %s1186, 0
          %s1196 = smul.addr %s1193, 2
          %s1197 = smul.addr %s1196, 8
          %s1198 = scalar_lea.hbm %s9, %s1197
          %s1199 = sshll.u32 %s1189, 4
          %s1200 = int_to_ptr.vmem [resolvable:$true] %s1199
          %s1201 = sshll.u32 %s1198, 4
          %s1202 = int_to_ptr.hbm [resolvable:$true] %s1201
          %1207 = dma.vmem_to_hbm [thread:$0]  %s1200, 4096, %s1202, %s1186, 256, 256, 16
        $region60: #{autoencoder_forward.1} parent=55 // pred_fallthru
          _
      $region56: #{autoencoder_forward.1} parent=5 // pred_fallthru
        _
      %p1208 = scmp.le.s32.totalorder 2, %s18
      // Predicated region
      $region61: #{autoencoder_forward.1} parent=5 // pred_check
        %p1209 = pneg %p1208
      $region62: #{autoencoder_forward.1} parent=5 // pred_check_branch
        %1211 = sbr.rel (%p1209) target = $region64
      $region63: #{autoencoder_forward.1} parent=5 // pred_region
        %s1212 = ssub.s32 %s18, 2
        // Predicated region
        $region65: #{autoencoder_forward.1} parent=63 // pred_check
          %p1213 = pneg %p241
        $region66: #{autoencoder_forward.1} parent=63 // pred_check_branch
          %1215 = sbr.rel (%p1213) target = $region68
        $region67: #{autoencoder_forward.1} parent=63 // pred_region
          %s1216 = sand.u32 %s226, 1
          %s1217 = scalar_lea.sflag [#allocation3], %s1216
          %s1218 = sand.u32 %s226, 1
          %s1219 = smul.addr %s1218, 256
          %s1220 = scalar_lea.vmem [#allocation2], %s1219
          %1222 = dma.done %s1217, 4096
        $region68: #{autoencoder_forward.1} parent=63 // pred_fallthru
          _
      $region64: #{autoencoder_forward.1} parent=5 // pred_fallthru
        _
    $region6: #{autoencoder_forward.1} parent=1 // loop_footer
      %s22 = sadd.s32 1, %s18
    $region7: #{autoencoder_forward.1} parent=1 // loop_footer_branch
      %17 = sbr.rel target = $region3
    $region8: #{autoencoder_forward.1} parent=1 // loop_exit
      _
    %1223 = vsyncpa [#allocation3], 1
    %s1224 = scalar_lea.sflag [#allocation3], 1
    %1225 = vsyncpa %s1224, 1

</llo_original>
